<compile_context>
chip_gen: v7x
topology: tpu7x:2x2x1
jax: 0.10.0
libtpu: 0.0.40
codegen_flags: <defaults>
</compile_context>

<pallas_src>
import numpy as np
import jax
import jax.numpy as jnp
from jax.experimental import pallas as pl
from jax.experimental.pallas import tpu as pltpu


def _round_up(x, m):
    return ((x + m - 1) // m) * m


def mlp_kernel(x_ref, w1_ref, b1_ref, w2_ref, b2_ref, o_ref):
    # x: (TM, P*D_in)   w1: (P*D_in, P*H)   b1: (1, P*H)
    # w2: (P*H, P*D_out)  b2: (1, P*D_out)  o: (TM, P*D_out)
    h = jnp.dot(x_ref[...], w1_ref[...], preferred_element_type=jnp.float32)
    h = jnp.maximum(h + b1_ref[...], 0.0)                  # bias + ReLU in f32
    y = jnp.dot(h.astype(w2_ref.dtype), w2_ref[...],
                preferred_element_type=jnp.float32) + b2_ref[...]
    o_ref[...] = y.astype(o_ref.dtype)


def mlp_forward(x, params, *, tile_rows=4096, matmul_dtype=jnp.bfloat16,
                out_dtype=jnp.float32):
    """Runs _MultiLayerPercep.forward on x of shape (..., D_in)."""
    w1, b1, w2, b2 = params['w1'], params['b1'], params['w2'], params['b2']
    D_in, H = w1.shape
    D_out = w2.shape[1]

    lead = x.shape[:-1]
    M = int(np.prod(lead)) if lead else 1
    x2 = x.reshape(M, D_in)

    # Lane-dense packing factor: pack P logical rows per physical row so the
    # output last dim becomes P*D_out == 128 (unmasked stores).  P=1 fallback
    # keeps correctness without ever needing a wrapper-side jnp.pad.
    P = 1
    if 0 < D_out < 128 and 128 % D_out == 0 and M % (128 // D_out) == 0:
        P = 128 // D_out

    if P > 1:
        eye = jnp.eye(P, dtype=w1.dtype)
        w1 = jnp.kron(eye, w1)                    # (P*D_in, P*H) block-diagonal
        w2 = jnp.kron(eye.astype(w2.dtype), w2)   # (P*H, P*D_out) block-diagonal
        b1 = jnp.tile(b1.reshape(1, -1), (1, P))
        b2 = jnp.tile(b2.reshape(1, -1), (1, P))
        x2 = x2.reshape(M // P, P * D_in)         # free row-major reshape
    else:
        b1 = b1.reshape(1, -1)
        b2 = b2.reshape(1, -1)

    if matmul_dtype is not None:
        # Under jit the convert of x fuses with its producer; ideally callers
        # hand x over already in matmul_dtype so only half the bytes stream.
        x2 = x2.astype(matmul_dtype)
        w1 = w1.astype(matmul_dtype)
        w2 = w2.astype(matmul_dtype)
    b1 = b1.astype(jnp.float32)
    b2 = b2.astype(jnp.float32)

    Mp, Kp = x2.shape          # packed rows / packed input width
    Hp = b1.shape[1]           # packed hidden width
    Np = b2.shape[1]           # packed output width

    # Row tile: large (amortizes the ~0.35 us/step pipeline overhead, working
    # set ~2-3 MiB double-buffered), but capped so the grid has >= 2 steps and
    # both v7x TensorCores get work.
    if Mp <= 8:
        tm = Mp                                          # full-array block
    else:
        tm = max(8, min(max(8, tile_rows // P),
                        _round_up(pl.cdiv(Mp, 2), 8)))
    grid = (pl.cdiv(Mp, tm),)

    out = pl.pallas_call(
        mlp_kernel,
        out_shape=jax.ShapeDtypeStruct((Mp, Np), out_dtype),
        grid=grid,
        in_specs=[
            pl.BlockSpec((tm, Kp), lambda i: (i, 0)),    # x tile (streamed)
            pl.BlockSpec((Kp, Hp), lambda i: (0, 0)),    # w1 (resident)
            pl.BlockSpec((1, Hp), lambda i: (0, 0)),     # b1 (resident)
            pl.BlockSpec((Hp, Np), lambda i: (0, 0)),    # w2 (resident)
            pl.BlockSpec((1, Np), lambda i: (0, 0)),     # b2 (resident)
        ],
        out_specs=pl.BlockSpec((tm, Np), lambda i: (i, 0)),
        compiler_params=pltpu.CompilerParams(
            dimension_semantics=("parallel",)),
    )(x2, w1, b1, w2, b2)

    # (Mp, P*D_out) row-major is bit-identical to (M, D_out): free reshape back.
    return out.reshape(M, D_out).reshape(*lead, D_out)


def reference_forward(x, params):
    """Pure-JAX mirror of the PyTorch module for correctness checks."""
    h = jnp.maximum(x @ params['w1'] + params['b1'], 0.0)
    return h @ params['w2'] + params['b2']


def init_params(key, input_dim, output_dim):
    """PyTorch nn.Linear default init (uniform +-1/sqrt(fan_in)); weights stored
    already transposed to (in, out)."""
    hidden = input_dim // 2
    k1, k2, k3, k4 = jax.random.split(key, 4)

    def w(k, fi, fo):
        s = 1.0 / np.sqrt(fi)
        return jax.random.uniform(k, (fi, fo), jnp.float32, -s, s)

    def b(k, fi, fo):
        s = 1.0 / np.sqrt(fi)
        return jax.random.uniform(k, (fo,), jnp.float32, -s, s)

    return dict(w1=w(k1, input_dim, hidden), b1=b(k2, input_dim, hidden),
                w2=w(k3, hidden, output_dim), b2=b(k4, hidden, output_dim))


if __name__ == "__main__":
    key = jax.random.PRNGKey(0)
    B, S, D_in, D_out = 2, 8, 64, 32            # hidden = D_in // 2 = 32
    kp, kx, kx2 = jax.random.split(key, 3)
    params = init_params(kp, D_in, D_out)

    # --- Small demo shape (single tile, lane-dense P=4 packing). ---
    x = jax.random.normal(kx, (B, S, D_in), jnp.float32)
    ref = jax.block_until_ready(reference_forward(x, params))

    # Exact f32 path (tight tolerance).
    out_f32 = jax.block_until_ready(mlp_forward(x, params, matmul_dtype=None))
    assert out_f32.shape == (B, S, D_out)
    np.testing.assert_allclose(np.asarray(out_f32), np.asarray(ref),
                               atol=1e-4, rtol=1e-4)

    # Default bf16 streaming path (looser tolerance, expected numerics change).
    out_bf16 = jax.block_until_ready(mlp_forward(x, params))
    np.testing.assert_allclose(np.asarray(out_bf16), np.asarray(ref),
                               atol=5e-2, rtol=5e-2)

    # --- Larger, non-tile-divisible row count: exercises the ragged last
    # block (masked boundary writes, no wrapper pad) and a 2-step parallel
    # grid that feeds both v7x TensorCores. ---
    x_big = jax.random.normal(kx2, (1000, D_in), jnp.float32)
    ref_big = jax.block_until_ready(reference_forward(x_big, params))

    out_big_f32 = jax.block_until_ready(
        mlp_forward(x_big, params, matmul_dtype=None))
    np.testing.assert_allclose(np.asarray(out_big_f32), np.asarray(ref_big),
                               atol=1e-4, rtol=1e-4)

    out_big_bf16 = jax.block_until_ready(mlp_forward(x_big, params))
    np.testing.assert_allclose(np.asarray(out_big_bf16), np.asarray(ref_big),
                               atol=5e-2, rtol=5e-2)

    print("KERNEL_OK")
</pallas_src>

<mosaic_0001>
module attributes {stable_mosaic.version = 11 : i64} {
  func.func @mlp_kernel(%arg0: i32, %arg1: memref<4x256xf32, #tpu.memory_space<vmem>>, %arg2: memref<256x128xf32, #tpu.memory_space<vmem>>, %arg3: memref<1x128xf32, #tpu.memory_space<vmem>>, %arg4: memref<128x128xf32, #tpu.memory_space<vmem>>, %arg5: memref<1x128xf32, #tpu.memory_space<vmem>>, %arg6: memref<4x128xf32, #tpu.memory_space<vmem>>) attributes {dimension_semantics = [#tpu.dimension_semantics<parallel>], iteration_bounds = array<i64: 1>, scalar_prefetch = 0 : i64, scratch_operands = 0 : i64, tpu.core_type = #tpu.core_type<tc>, window_params = [{transform_indices = @transform_0, window_bounds = array<i64: 4, 256>}, {pipeline_mode = #tpu.pipeline_mode<synchronous>, transform_indices = @transform_1, window_bounds = array<i64: 256, 128>}, {pipeline_mode = #tpu.pipeline_mode<synchronous>, transform_indices = @transform_2, window_bounds = array<i64: 1, 128>}, {pipeline_mode = #tpu.pipeline_mode<synchronous>, transform_indices = @transform_3, window_bounds = array<i64: 128, 128>}, {pipeline_mode = #tpu.pipeline_mode<synchronous>, transform_indices = @transform_4, window_bounds = array<i64: 1, 128>}, {transform_indices = @transform_5, window_bounds = array<i64: 4, 128>}]} {
    %c0 = arith.constant 0 : index
    %c0_0 = arith.constant 0 : index
    %0 = vector.load %arg1[%c0, %c0_0] : memref<4x256xf32, #tpu.memory_space<vmem>>, vector<4x256xf32>
    %c0_1 = arith.constant 0 : index
    %c0_2 = arith.constant 0 : index
    %1 = vector.load %arg2[%c0_1, %c0_2] : memref<256x128xf32, #tpu.memory_space<vmem>>, vector<256x128xf32>
    %cst = arith.constant dense<0.000000e+00> : vector<4x128xf32>
    %2 = tpu.matmul %0, %1, %cst {dimension_numbers = #tpu.dot_dimension_numbers<[1], [0], [0], [1], [0, 0, 1, 1], [], []>} : vector<4x256xf32>, vector<256x128xf32>, vector<4x128xf32> -> vector<4x128xf32>
    %c0_3 = arith.constant 0 : index
    %c0_4 = arith.constant 0 : index
    %3 = vector.load %arg3[%c0_3, %c0_4] : memref<1x128xf32, #tpu.memory_space<vmem>>, vector<1x128xf32>
    %4 = vector.broadcast %3 : vector<1x128xf32> to vector<4x128xf32>
    %5 = arith.addf %2, %4 : vector<4x128xf32>
    %cst_5 = arith.constant 0.000000e+00 : f32
    %6 = vector.broadcast %cst_5 : f32 to vector<4x128xf32>
    %7 = arith.maximumf %5, %6 : vector<4x128xf32>
    %c0_6 = arith.constant 0 : index
    %c0_7 = arith.constant 0 : index
    %8 = vector.load %arg4[%c0_6, %c0_7] : memref<128x128xf32, #tpu.memory_space<vmem>>, vector<128x128xf32>
    %cst_8 = arith.constant dense<0.000000e+00> : vector<4x128xf32>
    %9 = tpu.matmul %7, %8, %cst_8 {dimension_numbers = #tpu.dot_dimension_numbers<[1], [0], [0], [1], [0, 0, 1, 1], [], []>} : vector<4x128xf32>, vector<128x128xf32>, vector<4x128xf32> -> vector<4x128xf32>
    %c0_9 = arith.constant 0 : index
    %c0_10 = arith.constant 0 : index
    %10 = vector.load %arg5[%c0_9, %c0_10] : memref<1x128xf32, #tpu.memory_space<vmem>>, vector<1x128xf32>
    %11 = vector.broadcast %10 : vector<1x128xf32> to vector<4x128xf32>
    %12 = arith.addf %9, %11 : vector<4x128xf32>
    %c0_11 = arith.constant 0 : index
    %c0_12 = arith.constant 0 : index
    %13 = vector.load %arg6[%c0_11, %c0_12] : memref<4x128xf32, #tpu.memory_space<vmem>>, vector<4x128xf32>
    tpu.vector_store %arg6[%c0_11, %c0_12], %12 {strides = array<i32>} : memref<4x128xf32, #tpu.memory_space<vmem>>, vector<4x128xf32>,
    return
  }
  func.func @transform_0(%arg0: i32) -> (i32, i32) {
    %c0_i32 = arith.constant 0 : i32
    %c0_i32_0 = arith.constant 0 : i32
    return %arg0, %c0_i32 : i32, i32
  }
  func.func @transform_1(%arg0: i32) -> (i32, i32) {
    %c0_i32 = arith.constant 0 : i32
    %c0_i32_0 = arith.constant 0 : i32
    %c0_i32_1 = arith.constant 0 : i32
    return %c0_i32, %c0_i32_0 : i32, i32
  }
  func.func @transform_2(%arg0: i32) -> (i32, i32) {
    %c0_i32 = arith.constant 0 : i32
    %c0_i32_0 = arith.constant 0 : i32
    %c0_i32_1 = arith.constant 0 : i32
    return %c0_i32, %c0_i32_0 : i32, i32
  }
  func.func @transform_3(%arg0: i32) -> (i32, i32) {
    %c0_i32 = arith.constant 0 : i32
    %c0_i32_0 = arith.constant 0 : i32
    %c0_i32_1 = arith.constant 0 : i32
    return %c0_i32, %c0_i32_0 : i32, i32
  }
  func.func @transform_4(%arg0: i32) -> (i32, i32) {
    %c0_i32 = arith.constant 0 : i32
    %c0_i32_0 = arith.constant 0 : i32
    %c0_i32_1 = arith.constant 0 : i32
    return %c0_i32, %c0_i32_0 : i32, i32
  }
  func.func @transform_5(%arg0: i32) -> (i32, i32) {
    %c0_i32 = arith.constant 0 : i32
    %c0_i32_0 = arith.constant 0 : i32
    return %arg0, %c0_i32 : i32, i32
  }
}

</mosaic_0001>

<llo_original>
// kernel: tpu_custom_call.1
$region0: #{tpu_custom_call.1}
  #allocation0 [shape = 'u32[]', space=smem, size = 0x4, offset = 0x4, fixed_abs, tag = 'smem constant byte address 0x4 - core index']
  #allocation1 [shape = 'u32[144,128]{1,0:T(1,128)}', space=vmem, size = 0x12000, scoped, tag = 'internal scratch']
  %s0 = inlined_call_operand.hbm [shape: f32[4,256], index: 0, kind: input, shape index: {}]
  %s1 = inlined_call_operand.hbm [shape: f32[256,128], index: 1, kind: input, shape index: {}]
  %s2 = inlined_call_operand.vmem [shape: f32[1,128], index: 2, kind: input, shape index: {}]
  %s3 = inlined_call_operand.hbm [shape: f32[128,128], index: 3, kind: input, shape index: {}]
  %s4 = inlined_call_operand.vmem [shape: f32[1,128], index: 4, kind: input, shape index: {}]
  %s5 = inlined_call_operand.hbm [shape: f32[4,128], index: 5, kind: output, shape index: {}]
  %s6 = sld [smem:[#allocation0]]
  $region42: #{tpu_custom_call.1} parent=0
    _
  %s8 = ssub.s32 1, %s6
  %s9 = scalar_select 0, %s8, %s6
  $region1: #{tpu_custom_call.1} parent=0
    #allocation2 [shape = 'u8[4096]{0}', space=vmem, size = 0x1000, scoped, tag = 'input window, operand 0, single buffered']
    #allocation3 [shape = 's32[1]{0}', space=sflag, size = 0x4, scoped, tag = 'scoped memory for tpu_custom_call.1']
    #allocation4 [shape = 's32[1]{0}', space=sflag, size = 0x4, scoped, tag = 'scoped memory for tpu_custom_call.1']
    #allocation5 [shape = 'u8[131072]{0}', space=vmem, size = 0x20000, scoped, tag = 'input window, operand 1, single buffered']
    #allocation6 [shape = 's32[1]{0}', space=sflag, size = 0x4, scoped, tag = 'scoped memory for tpu_custom_call.1']
    #allocation7 [shape = 'u8[65536]{0}', space=vmem, size = 0x10000, scoped, tag = 'input window, operand 3, single buffered']
    #allocation8 [shape = 'u8[2048]{0}', space=vmem, size = 0x800, scoped, tag = 'output window, operand 0, single buffered']
    %10 = vsyncpa [#allocation3], 0
    %11 = vsyncpa [#allocation6], 0
    %12 = vsyncpa [#allocation4], 0
    // Predicated region
    $region2: #{tpu_custom_call.1} parent=1 // pred_check
      _
    $region3: #{tpu_custom_call.1} parent=1 // pred_check_branch
      %14 = sbr.rel (0) target = $region5
    $region4: #{tpu_custom_call.1} parent=1 // pred_region
      %s16 = ssub.s32 128, 128
      %17 = vsyncadd [#allocation3], %s16
      %s19 = sshll.u32 [#allocation2], 4
      %s20 = int_to_ptr.vmem [resolvable:$true] %s19
      %22 = dma.hbm_to_vmem [thread:$0]  %s0, 128, %s20, [#allocation3]
    $region5: #{tpu_custom_call.1} parent=1 // pred_fallthru
      _
    // Predicated region
    $region6: #{tpu_custom_call.1} parent=1 // pred_check
      _
    $region7: #{tpu_custom_call.1} parent=1 // pred_check_branch
      %24 = sbr.rel (0) target = $region9
    $region8: #{tpu_custom_call.1} parent=1 // pred_region
      %s26 = ssub.s32 4096, 4096
      %27 = vsyncadd [#allocation6], %s26
      %s28 = sshll.u32 [#allocation5], 4
      %s29 = int_to_ptr.vmem [resolvable:$true] %s28
      %34 = dma.hbm_to_vmem [thread:$0]  %s1, 4096, %s29, [#allocation6], 128, 128, 8
    $region9: #{tpu_custom_call.1} parent=1 // pred_fallthru
      _
    // Predicated region
    $region10: #{tpu_custom_call.1} parent=1 // pred_check
      _
    $region11: #{tpu_custom_call.1} parent=1 // pred_check_branch
      %36 = sbr.rel (0) target = $region13
    $region12: #{tpu_custom_call.1} parent=1 // pred_region
      _
    $region13: #{tpu_custom_call.1} parent=1 // pred_fallthru
      _
    // Predicated region
    $region14: #{tpu_custom_call.1} parent=1 // pred_check
      _
    $region15: #{tpu_custom_call.1} parent=1 // pred_check_branch
      %38 = sbr.rel (0) target = $region17
    $region16: #{tpu_custom_call.1} parent=1 // pred_region
      %s40 = ssub.s32 2048, 2048
      %41 = vsyncadd [#allocation6], %s40
      %s42 = sshll.u32 [#allocation7], 4
      %s43 = int_to_ptr.vmem [resolvable:$true] %s42
      %48 = dma.hbm_to_vmem [thread:$0]  %s3, 2048, %s43, [#allocation6], 128, 128, 8
    $region17: #{tpu_custom_call.1} parent=1 // pred_fallthru
      _
    // Predicated region
    $region18: #{tpu_custom_call.1} parent=1 // pred_check
      _
    $region19: #{tpu_custom_call.1} parent=1 // pred_check_branch
      %50 = sbr.rel (0) target = $region21
    $region20: #{tpu_custom_call.1} parent=1 // pred_region
      _
    $region21: #{tpu_custom_call.1} parent=1 // pred_fallthru
      _
    // Predicated region
    $region22: #{tpu_custom_call.1} parent=1 // pred_check
      _
    $region23: #{tpu_custom_call.1} parent=1 // pred_check_branch
      %52 = sbr.rel (0) target = $region25
    $region24: #{tpu_custom_call.1} parent=1 // pred_region
      %53 = dma.done [#allocation3], 128
    $region25: #{tpu_custom_call.1} parent=1 // pred_fallthru
      _
    // Predicated region
    $region26: #{tpu_custom_call.1} parent=1 // pred_check
      _
    $region27: #{tpu_custom_call.1} parent=1 // pred_check_branch
      %55 = sbr.rel (0) target = $region29
    $region28: #{tpu_custom_call.1} parent=1 // pred_region
      %56 = dma.done [#allocation6], 4096
    $region29: #{tpu_custom_call.1} parent=1 // pred_fallthru
      _
    // Predicated region
    $region30: #{tpu_custom_call.1} parent=1 // pred_check
      _
    $region31: #{tpu_custom_call.1} parent=1 // pred_check_branch
      %58 = sbr.rel (0) target = $region33
    $region32: #{tpu_custom_call.1} parent=1 // pred_region
      %59 = dma.done [#allocation6], 2048
    $region33: #{tpu_custom_call.1} parent=1 // pred_fallthru
      _
    %v60 = vld [vmem:[#allocation2] sm:$0xff]
    %v61 = vld [vmem:[#allocation5] sm:$0xff]
    %v62 = vld [vmem:[#allocation5 + $0x8] sm:$0xff]
    %v63 = vld [vmem:[#allocation5 + $0x10] sm:$0xff]
    %v64 = vld [vmem:[#allocation5 + $0x18] sm:$0xff]
    %v65 = vld [vmem:[#allocation5 + $0x20] sm:$0xff]
    %v66 = vld [vmem:[#allocation5 + $0x28] sm:$0xff]
    %v67 = vld [vmem:[#allocation5 + $0x30] sm:$0xff]
    %v68 = vld [vmem:[#allocation5 + $0x38] sm:$0xff]
    %v69 = vld [vmem:[#allocation5 + $0x40] sm:$0xff]
    %v70 = vld [vmem:[#allocation5 + $0x48] sm:$0xff]
    %v71 = vld [vmem:[#allocation5 + $0x50] sm:$0xff]
    %v72 = vld [vmem:[#allocation5 + $0x58] sm:$0xff]
    %v73 = vld [vmem:[#allocation5 + $0x60] sm:$0xff]
    %v74 = vld [vmem:[#allocation5 + $0x68] sm:$0xff]
    %v75 = vld [vmem:[#allocation5 + $0x70] sm:$0xff]
    %v76 = vld [vmem:[#allocation5 + $0x78] sm:$0xff]
    %v77 = vld [vmem:[#allocation5 + $0x80] sm:$0xff]
    %v78 = vld [vmem:[#allocation5 + $0x88] sm:$0xff]
    %v79 = vld [vmem:[#allocation5 + $0x90] sm:$0xff]
    %v80 = vld [vmem:[#allocation5 + $0x98] sm:$0xff]
    %v81 = vld [vmem:[#allocation5 + $0xa0] sm:$0xff]
    %v82 = vld [vmem:[#allocation5 + $0xa8] sm:$0xff]
    %v83 = vld [vmem:[#allocation5 + $0xb0] sm:$0xff]
    %v84 = vld [vmem:[#allocation5 + $0xb8] sm:$0xff]
    %v85 = vld [vmem:[#allocation5 + $0xc0] sm:$0xff]
    %v86 = vld [vmem:[#allocation5 + $0xc8] sm:$0xff]
    %v87 = vld [vmem:[#allocation5 + $0xd0] sm:$0xff]
    %v88 = vld [vmem:[#allocation5 + $0xd8] sm:$0xff]
    %v89 = vld [vmem:[#allocation5 + $0xe0] sm:$0xff]
    %v90 = vld [vmem:[#allocation5 + $0xe8] sm:$0xff]
    %v91 = vld [vmem:[#allocation5 + $0xf0] sm:$0xff]
    %v92 = vld [vmem:[#allocation5 + $0xf8] sm:$0xff]
    %v93 = vld [vmem:[%s2] sm:$0x1]
    %v95 = vlaneseq
    %v96 = vshrl.u32 %v95, 7
    %v97 = vsub.s32 0, %v96
    %v98 = vrot.slane %v93, %v97
    %v101 = vcombine.high %v60, %v60
    %103 = vmatprep.subr.mxu0 0.0
    %104 = vmatpush1.msra.mxu0 %v61
    %105 = vmatprep.subr.mxu0 0.0
    %106 = vmatpush1.msra.mxu0 %v62
    %107 = vmatprep.subr.mxu0 0.0
    %108 = vmatpush1.msra.mxu0 %v63
    %109 = vmatprep.subr.mxu0 0.0
    %110 = vmatpush1.msra.mxu0 %v64
    %111 = vmatprep.subr.mxu0 0.0
    %112 = vmatpush1.msra.mxu0 %v65
    %113 = vmatprep.subr.mxu0 0.0
    %114 = vmatpush1.msra.mxu0 %v66
    %115 = vmatprep.subr.mxu0 0.0
    %116 = vmatpush1.msra.mxu0 %v67
    %117 = vmatprep.subr.mxu0 0.0
    %118 = vmatpush1.msra.mxu0 %v68
    %119 = vmatprep.subr.mxu0 0.0
    %120 = vmatpush1.msra.mxu0 %v69
    %121 = vmatprep.subr.mxu0 0.0
    %122 = vmatpush1.msra.mxu0 %v70
    %123 = vmatprep.subr.mxu0 0.0
    %124 = vmatpush1.msra.mxu0 %v71
    %125 = vmatprep.subr.mxu0 0.0
    %126 = vmatpush1.msra.mxu0 %v72
    %127 = vmatprep.subr.mxu0 0.0
    %128 = vmatpush1.msra.mxu0 %v73
    %129 = vmatprep.subr.mxu0 0.0
    %130 = vmatpush1.msra.mxu0 %v74
    %131 = vmatprep.subr.mxu0 0.0
    %132 = vmatpush1.msra.mxu0 %v75
    %133 = vmatprep.subr.mxu0 0.0
    %134 = vmatpush1.msra.mxu0 %v76
    %135 = vmatprep.subr.mxu0 0.0
    %136 = vmatpush1.msra.mxu0 %v77
    %137 = vmatprep.subr.mxu0 0.0
    %138 = vmatpush1.msra.mxu0 %v78
    %139 = vmatprep.subr.mxu0 0.0
    %140 = vmatpush1.msra.mxu0 %v79
    %141 = vmatprep.subr.mxu0 0.0
    %142 = vmatpush1.msra.mxu0 %v80
    %143 = vmatprep.subr.mxu0 0.0
    %144 = vmatpush1.msra.mxu0 %v81
    %145 = vmatprep.subr.mxu0 0.0
    %146 = vmatpush1.msra.mxu0 %v82
    %147 = vmatprep.subr.mxu0 0.0
    %148 = vmatpush1.msra.mxu0 %v83
    %149 = vmatprep.subr.mxu0 0.0
    %150 = vmatpush1.msra.mxu0 %v84
    %151 = vmatprep.subr.mxu0 0.0
    %152 = vmatpush1.msra.mxu0 %v85
    %153 = vmatprep.subr.mxu0 0.0
    %154 = vmatpush1.msra.mxu0 %v86
    %155 = vmatprep.subr.mxu0 0.0
    %156 = vmatpush1.msra.mxu0 %v87
    %157 = vmatprep.subr.mxu0 0.0
    %158 = vmatpush1.msra.mxu0 %v88
    %159 = vmatprep.subr.mxu0 0.0
    %160 = vmatpush1.msra.mxu0 %v89
    %161 = vmatprep.subr.mxu0 0.0
    %162 = vmatpush1.msra.mxu0 %v90
    %163 = vmatprep.subr.mxu0 0.0
    %164 = vmatpush1.msra.mxu0 %v91
    %165 = vmatprep.subr.mxu0 0.0
    %166 = vmatpush1.msra.mxu0 %v92
    %167 = vmatprep.mubr.f32.mxu0 %v101
    %168 = vmatmul.mubr.f32.gmra.mrb[0].mxu0 %v60
    %v169 = vpop.f32.mrb[0].mxu0
    %v170 = vadd.f32 %v98, %v169
    %v171 = vpop.f32.mrb[0].mxu0
    %172 = vdwg.mxu0
    %v173 = vmax.f32 %v170, 0.0
    %v174 = vld [vmem:[#allocation7] sm:$0xff]
    %v175 = vld [vmem:[#allocation7 + $0x8] sm:$0xff]
    %v176 = vld [vmem:[#allocation7 + $0x10] sm:$0xff]
    %v177 = vld [vmem:[#allocation7 + $0x18] sm:$0xff]
    %v178 = vld [vmem:[#allocation7 + $0x20] sm:$0xff]
    %v179 = vld [vmem:[#allocation7 + $0x28] sm:$0xff]
    %v180 = vld [vmem:[#allocation7 + $0x30] sm:$0xff]
    %v181 = vld [vmem:[#allocation7 + $0x38] sm:$0xff]
    %v182 = vld [vmem:[#allocation7 + $0x40] sm:$0xff]
    %v183 = vld [vmem:[#allocation7 + $0x48] sm:$0xff]
    %v184 = vld [vmem:[#allocation7 + $0x50] sm:$0xff]
    %v185 = vld [vmem:[#allocation7 + $0x58] sm:$0xff]
    %v186 = vld [vmem:[#allocation7 + $0x60] sm:$0xff]
    %v187 = vld [vmem:[#allocation7 + $0x68] sm:$0xff]
    %v188 = vld [vmem:[#allocation7 + $0x70] sm:$0xff]
    %v189 = vld [vmem:[#allocation7 + $0x78] sm:$0xff]
    %v190 = vld [vmem:[%s4] sm:$0x1]
    %v192 = vlaneseq
    %v193 = vshrl.u32 %v192, 7
    %v194 = vsub.s32 0, %v193
    %v195 = vrot.slane %v190, %v194
    %197 = vmatprep.subr.mxu0 0.0
    %198 = vmatpush1.msra.mxu0 %v174
    %199 = vmatprep.subr.mxu0 0.0
    %200 = vmatpush1.msra.mxu0 %v175
    %201 = vmatprep.subr.mxu0 0.0
    %202 = vmatpush1.msra.mxu0 %v176
    %203 = vmatprep.subr.mxu0 0.0
    %204 = vmatpush1.msra.mxu0 %v177
    %205 = vmatprep.subr.mxu0 0.0
    %206 = vmatpush1.msra.mxu0 %v178
    %207 = vmatprep.subr.mxu0 0.0
    %208 = vmatpush1.msra.mxu0 %v179
    %209 = vmatprep.subr.mxu0 0.0
    %210 = vmatpush1.msra.mxu0 %v180
    %211 = vmatprep.subr.mxu0 0.0
    %212 = vmatpush1.msra.mxu0 %v181
    %213 = vmatprep.subr.mxu0 0.0
    %214 = vmatpush1.msra.mxu0 %v182
    %215 = vmatprep.subr.mxu0 0.0
    %216 = vmatpush1.msra.mxu0 %v183
    %217 = vmatprep.subr.mxu0 0.0
    %218 = vmatpush1.msra.mxu0 %v184
    %219 = vmatprep.subr.mxu0 0.0
    %220 = vmatpush1.msra.mxu0 %v185
    %221 = vmatprep.subr.mxu0 0.0
    %222 = vmatpush1.msra.mxu0 %v186
    %223 = vmatprep.subr.mxu0 0.0
    %224 = vmatpush1.msra.mxu0 %v187
    %225 = vmatprep.subr.mxu0 0.0
    %226 = vmatpush1.msra.mxu0 %v188
    %227 = vmatprep.subr.mxu0 0.0
    %228 = vmatpush1.msra.mxu0 %v189
    %229 = vmatprep.subr.mxu0 0.0
    %230 = vmatpush1.msra.mxu0 0.0
    %231 = vmatprep.subr.mxu0 0.0
    %232 = vmatpush1.msra.mxu0 0.0
    %233 = vmatprep.subr.mxu0 0.0
    %234 = vmatpush1.msra.mxu0 0.0
    %235 = vmatprep.subr.mxu0 0.0
    %236 = vmatpush1.msra.mxu0 0.0
    %237 = vmatprep.subr.mxu0 0.0
    %238 = vmatpush1.msra.mxu0 0.0
    %239 = vmatprep.subr.mxu0 0.0
    %240 = vmatpush1.msra.mxu0 0.0
    %241 = vmatprep.subr.mxu0 0.0
    %242 = vmatpush1.msra.mxu0 0.0
    %243 = vmatprep.subr.mxu0 0.0
    %244 = vmatpush1.msra.mxu0 0.0
    %245 = vmatprep.subr.mxu0 0.0
    %246 = vmatpush1.msra.mxu0 0.0
    %247 = vmatprep.subr.mxu0 0.0
    %248 = vmatpush1.msra.mxu0 0.0
    %249 = vmatprep.subr.mxu0 0.0
    %250 = vmatpush1.msra.mxu0 0.0
    %251 = vmatprep.subr.mxu0 0.0
    %252 = vmatpush1.msra.mxu0 0.0
    %253 = vmatprep.subr.mxu0 0.0
    %254 = vmatpush1.msra.mxu0 0.0
    %255 = vmatprep.subr.mxu0 0.0
    %256 = vmatpush1.msra.mxu0 0.0
    %257 = vmatprep.subr.mxu0 0.0
    %258 = vmatpush1.msra.mxu0 0.0
    %259 = vmatprep.subr.mxu0 0.0
    %260 = vmatpush1.msra.mxu0 0.0
    %261 = vmatprep.mubr.f32.mxu0 0.0
    %262 = vmatmul.mubr.f32.gmra.mrb[0].mxu0 %v173
    %v263 = vpop.f32.mrb[0].mxu0
    %v264 = vadd.f32 %v195, %v263
    %v265 = vpop.f32.mrb[0].mxu0
    %266 = vdwg.mxu0
    %267 = vst [vmem:[#allocation8] sm:$0xf] %v264
    // Predicated region
    $region34: #{tpu_custom_call.1} parent=1 // pred_check
      _
    $region35: #{tpu_custom_call.1} parent=1 // pred_check_branch
      %269 = sbr.rel (0) target = $region37
    $region36: #{tpu_custom_call.1} parent=1 // pred_region
      %s271 = ssub.s32 64, 64
      %272 = vsyncadd [#allocation4], %s271
      %s274 = sshll.u32 [#allocation8], 4
      %s275 = int_to_ptr.vmem [resolvable:$true] %s274
      %277 = dma.vmem_to_hbm [thread:$0]  %s275, 64, %s5, [#allocation4]
    $region37: #{tpu_custom_call.1} parent=1 // pred_fallthru
      _
    // Predicated region
    $region38: #{tpu_custom_call.1} parent=1 // pred_check
      _
    $region39: #{tpu_custom_call.1} parent=1 // pred_check_branch
      %279 = sbr.rel (0) target = $region41
    $region40: #{tpu_custom_call.1} parent=1 // pred_region
      %280 = dma.done [#allocation4], 64
    $region41: #{tpu_custom_call.1} parent=1 // pred_fallthru
      _
    %281 = vsyncpa [#allocation3], 1
    %282 = vsyncpa [#allocation6], 1
    %283 = vsyncpa [#allocation4], 1

</llo_original>
